<compile_context>
chip_gen: v7x
topology: tpu7x:2x2x1
jax: 0.10.0
libtpu: 0.0.40
codegen_flags: <defaults>
</compile_context>

<pallas_src>
import functools

import jax
import jax.numpy as jnp
from jax import lax
from jax.experimental import pallas as pl
from jax.experimental.pallas import tpu as pltpu


def _round_up(x, m):
    return (x + m - 1) // m * m


def _vmem_capacity_bytes():
    """Physical VMEM per TensorCore (conservative fallback = v7x's 64 MiB)."""
    try:
        info = pltpu.get_tpu_info()
        for attr in ("vmem_capacity_bytes", "vmem_size_bytes", "vmem_bytes"):
            v = getattr(info, attr, None)
            if v:
                return int(v)
    except Exception:
        pass
    return 64 << 20


def _supcon_kernel(fa_ref, fc_ref, la_ref, lc_ref, out_ref,
                   m_sc, l_sc, s_sc, c_sc,
                   *, scale, n_valid, tm, tk, contrast_resident):
    i = pl.program_id(0)            # anchor tile    ("parallel")
    j = pl.program_id(1)            # contrast tile  ("arbitrary", innermost)
    nj = pl.num_programs(1)

    @pl.when(j == 0)
    def _init():
        m_sc[...] = jnp.full(m_sc.shape, -jnp.inf, jnp.float32)
        l_sc[...] = jnp.zeros(l_sc.shape, jnp.float32)
        s_sc[...] = jnp.zeros(s_sc.shape, jnp.float32)
        c_sc[...] = jnp.zeros(c_sc.shape, jnp.float32)

    off = pl.multiple_of(j * tk, tk)
    if contrast_resident:
        fc = fc_ref[pl.ds(off, tk), :]        # slice resident slab: DMA'd once
    else:
        fc = fc_ref[...]                      # streamed (TK, D) tile
    lc = lc_ref[pl.ds(off, tk), :]            # resident (N_pad,1) label column

    fa = fa_ref[...]                          # (TM, D), pre-scaled by 1/T, compute dtype
    la = la_ref[...]                          # (1, TM) int32 anchor labels
    # Logits tile laid out (contrast, anchor): per-anchor reductions are over
    # sublanes; all per-anchor state and the output stay lane-dense. f32 MXU acc.
    logits = lax.dot_general(fc, fa, (((1,), (1,)), ((), ())),
                             preferred_element_type=jnp.float32)      # (TK, TM)

    # Positive-pair candidates: same label.  Padded contrast rows carry label -1,
    # valid labels are >= 0, so padding is excluded here for free; padded anchor
    # lanes are sliced off outside the kernel.
    pos0 = lc == la                                                   # (TK, TM) bool

    # Scalar gates: does this tile touch the diagonal / padded contrast rows?
    diag_here = jnp.logical_and(j * tk < (i + 1) * tm, (j + 1) * tk > i * tm)
    pad_here = (j + 1) * tk > n_valid
    needs_mask = jnp.logical_or(diag_here, pad_here)

    def _acc(lg, pos):
        # Online log-sum-exp over the contrast (sublane) axis + positive sums.
        m_prev = m_sc[...]                                            # (1, TM)
        m_new = jnp.maximum(m_prev, jnp.max(lg, axis=0, keepdims=True))
        alpha = jnp.exp(m_prev - m_new)
        p = jnp.exp(lg - m_new)
        l_sc[...] = alpha * l_sc[...] + jnp.sum(p, axis=0, keepdims=True)
        m_sc[...] = m_new
        pos_f = pos.astype(jnp.float32)
        s_sc[...] = s_sc[...] + jnp.sum(pos_f * lg, axis=0, keepdims=True)
        c_sc[...] = c_sc[...] + jnp.sum(pos_f, axis=0, keepdims=True)

    @pl.when(jnp.logical_not(needs_mask))
    def _interior_tile():                     # common case: zero masking work
        _acc(logits, pos0)

    @pl.when(needs_mask)
    def _edge_tile():                         # diagonal- and/or padding-carrying tile
        row_ids = j * tk + lax.broadcasted_iota(jnp.int32, (tk, 1), 0)   # contrast ids
        col_ids = i * tm + lax.broadcasted_iota(jnp.int32, (1, tm), 1)   # anchor ids
        excluded = jnp.logical_or(row_ids == col_ids, row_ids >= n_valid)
        lg = jnp.where(excluded, jnp.float32(-1e30), logits)
        pos = jnp.logical_and(pos0, jnp.logical_not(excluded))
        _acc(lg, pos)

    @pl.when(j == nj - 1)
    def _fin():
        # Row-max shift of the torch code cancels analytically:
        #   loss_i = -(T/base_T) * (mean_{pos} adc_ik/T  -  logsumexp_{k!=i} adc_ik/T)
        lse = m_sc[...] + jnp.log(l_sc[...])
        mean_pos = s_sc[...] / c_sc[...]      # exact divide; 0 positives -> NaN like torch
        out_ref[...] = (-scale) * (mean_pos - lse)                    # (1, TM) lane-dense


def _supcon_per_anchor(feats, labels, temperature, base_temperature, fast,
                       contrast_resident_override=None):
    """Per-anchor SupCon loss (length-N vector) via the tiled Pallas kernel."""
    N, D = feats.shape
    N128 = _round_up(max(N, 1), 128)
    # TM = anchor/lane/output tile; use 256 only when that still gives >=2 anchor
    # tiles (keeps both v7x TensorCores busy).  TK = contrast/sublane tile.
    TM = 256 if N128 >= 512 else 128
    TK = 128
    N_pad = _round_up(max(N, 1), TM)          # TK divides TM, so also a TK multiple
    D_pad = _round_up(D, 128)

    compute_dtype = jnp.bfloat16 if fast else jnp.float32
    cbytes = 2 if fast else 4

    f32 = jnp.pad(feats.astype(jnp.float32), ((0, N_pad - N), (0, D_pad - D)))
    # Pre-scale (1/T) + cast the anchor copy once in HBM; contrasts cast once.
    fa = (f32 * (1.0 / float(temperature))).astype(compute_dtype)
    fc = f32.astype(compute_dtype)
    lbl = jnp.pad(labels.astype(jnp.int32), (0, N_pad - N), constant_values=-1)
    la_row = lbl.reshape(1, N_pad)            # anchor labels, lane layout
    lc_col = lbl.reshape(N_pad, 1)            # contrast labels, sublane layout (resident)

    phys_vmem = _vmem_capacity_bytes()
    slab_bytes = N_pad * D_pad * cbytes
    if contrast_resident_override is None:
        contrast_resident = 2 * slab_bytes <= min(16 << 20, phys_vmem // 4)
    else:
        contrast_resident = bool(contrast_resident_override)

    if contrast_resident:
        fc_spec = pl.BlockSpec((N_pad, D_pad), lambda i, j: (0, 0))   # DMA'd once
        fc_bytes = 2 * slab_bytes
    else:
        fc_spec = pl.BlockSpec((TK, D_pad), lambda i, j: (j, 0))      # streamed
        fc_bytes = 2 * TK * D_pad * cbytes

    vmem_bytes = (
        2 * TM * D_pad * cbytes               # double-buffered anchor tiles
        + fc_bytes                            # contrast slab / streamed tiles
        + 2 * N_pad * 512                     # resident label column (lane-padded)
        + 2 * 8 * TM * 4 * 2                  # anchor-label + output blocks
        + 4 * 8 * TM * 4                      # (1,TM) accumulators
        + 8 * TK * TM * 4)                    # in-kernel f32 temporaries headroom
    vmem_cap = (phys_vmem * 3) // 4           # leave headroom (<=48 MiB on v7x)
    vmem_limit = int(min(max(vmem_bytes + (4 << 20), 32 << 20), vmem_cap))
    vmem_limit = int(max(vmem_limit, min(vmem_bytes + (2 << 20), phys_vmem)))

    kernel = functools.partial(
        _supcon_kernel,
        scale=float(temperature / base_temperature),
        n_valid=int(N), tm=TM, tk=TK,
        contrast_resident=contrast_resident)

    out = pl.pallas_call(
        kernel,
        out_shape=jax.ShapeDtypeStruct((1, N_pad), jnp.float32),
        grid_spec=pltpu.PrefetchScalarGridSpec(
            num_scalar_prefetch=0,
            grid=(N_pad // TM, N_pad // TK),
            in_specs=[
                pl.BlockSpec((TM, D_pad), lambda i, j: (i, 0)),   # anchors (pre-scaled)
                fc_spec,                                          # contrasts
                pl.BlockSpec((1, TM), lambda i, j: (0, i)),       # anchor labels (lanes)
                pl.BlockSpec((N_pad, 1), lambda i, j: (0, 0)),    # contrast labels (resident)
            ],
            out_specs=pl.BlockSpec((1, TM), lambda i, j: (0, i)),
            scratch_shapes=[
                pltpu.VMEM((1, TM), jnp.float32),   # running max
                pltpu.VMEM((1, TM), jnp.float32),   # running exp-sum
                pltpu.VMEM((1, TM), jnp.float32),   # running positive logit sum
                pltpu.VMEM((1, TM), jnp.float32),   # running positive count
            ]),
        compiler_params=pltpu.CompilerParams(
            dimension_semantics=("parallel", "arbitrary"),
            vmem_limit_bytes=vmem_limit),
    )(fa, fc, la_row, lc_col)
    return out[0, :N]


def my_supcon_loss(features, labels, target_labels=None, temperature=0.07,
                   contrast_mode="all", base_temperature=0.07, reduction="mean",
                   fast=True, contrast_resident=None):
    """JAX/Pallas equivalent of MySupConLoss.forward (labels path, mode='all')."""
    if contrast_mode != "all":
        # TODO(synk): contrast_mode='one' (single-anchor view) not implemented.
        raise ValueError("only contrast_mode='all' implemented")
    if labels is None:
        # TODO(synk): explicit `mask=` / labels-free (identity-mask) path not implemented.
        raise ValueError("labels are required (mask-only path not implemented)")
    features = jnp.asarray(features)
    if features.ndim == 2:
        features = features[:, None, :]
    if features.ndim > 3:
        features = features.reshape(features.shape[0], features.shape[1], -1)

    B, V, D = features.shape
    N = V * B
    labels = jnp.asarray(labels).reshape(-1)
    if labels.shape[0] != B:
        raise ValueError("Num of labels does not match num of features")

    # contrast_feature = torch.cat(torch.unbind(features, dim=1), dim=0)  (view-major)
    contrast_feature = jnp.transpose(features, (1, 0, 2)).reshape(N, D)
    lbl_tiled = jnp.tile(labels, V)                     # labels per anchor row

    loss = _supcon_per_anchor(contrast_feature, lbl_tiled, temperature,
                              base_temperature, fast,
                              contrast_resident_override=contrast_resident)   # (N,)

    if target_labels is not None:
        curr_class_mask = jnp.zeros_like(labels)
        for tc in target_labels:
            curr_class_mask = curr_class_mask + (labels == tc).astype(labels.dtype)
        curr_class_mask = curr_class_mask.reshape(-1)
        loss = curr_class_mask.astype(loss.dtype) * loss.reshape(V, B)

    # Reduction semantics kept faithful to the PyTorch module (including its
    # shape quirks when target_labels is None).
    if reduction == "mean":
        return loss.mean()
    elif reduction == "none":
        return loss.mean(0)
    elif reduction == "keep_dim":
        return loss
    else:
        raise ValueError(f"loss reduction not supported: {reduction}")


def _reference_supcon(features, labels, target_labels, temperature=0.07,
                      base_temperature=0.07):
    """Pure-JAX reference mirroring the PyTorch forward, for verification."""
    B, V, D = features.shape
    N = V * B
    cf = jnp.transpose(features, (1, 0, 2)).reshape(N, D).astype(jnp.float32)
    adc = lax.dot_general(cf, cf, (((1,), (1,)), ((), ())),
                          precision=lax.Precision.HIGHEST) / temperature
    logits = adc - jnp.max(adc, axis=1, keepdims=True)
    mask = (labels.reshape(-1, 1) == labels.reshape(1, -1)).astype(jnp.float32)
    mask = jnp.tile(mask, (V, V))
    logits_mask = 1.0 - jnp.eye(N, dtype=jnp.float32)
    mask = mask * logits_mask
    exp_logits = jnp.exp(logits) * logits_mask
    log_prob = logits - jnp.log(exp_logits.sum(1, keepdims=True))
    mean_log_prob_pos = (mask * log_prob).sum(1) / mask.sum(1)
    loss = -(temperature / base_temperature) * mean_log_prob_pos
    curr = jnp.zeros_like(labels)
    for tc in target_labels:
        curr = curr + (labels == tc).astype(labels.dtype)
    loss = curr.reshape(-1).astype(loss.dtype) * loss.reshape(V, B)
    return loss.mean()


if __name__ == "__main__":
    key = jax.random.PRNGKey(0)
    kf, kl, kf2, kl2 = jax.random.split(key, 4)

    # --- Test 1: small single-tile grid (N=16) ---------------------------------
    B, V, D = 8, 2, 32
    feats = jax.random.normal(kf, (B, V, D), dtype=jnp.float32)
    feats = feats / jnp.linalg.norm(feats, axis=-1, keepdims=True)
    labels = jax.random.randint(kl, (B,), 0, 4, dtype=jnp.int32)
    target_labels = [0, 1]

    ref = _reference_supcon(feats, labels, target_labels)
    out_exact = jax.block_until_ready(
        my_supcon_loss(feats, labels, target_labels=target_labels, fast=False))
    assert jnp.allclose(out_exact, ref, rtol=1e-4, atol=1e-4), (out_exact, ref)
    out_fast = jax.block_until_ready(
        my_supcon_loss(feats, labels, target_labels=target_labels, fast=True))
    assert jnp.allclose(out_fast, ref, rtol=5e-2, atol=5e-2), (out_fast, ref)

    # --- Test 2: multi-tile grid (N=160 -> 2x2), row/feature padding, both the
    #     interior fast path and the masked edge path, resident & streamed contrasts.
    B2, V2, D2 = 80, 2, 40
    feats2 = jax.random.normal(kf2, (B2, V2, D2), dtype=jnp.float32)
    feats2 = feats2 / jnp.linalg.norm(feats2, axis=-1, keepdims=True)
    labels2 = jax.random.randint(kl2, (B2,), 0, 5, dtype=jnp.int32)
    tl2 = [0, 2]

    ref2 = _reference_supcon(feats2, labels2, tl2)
    out2_exact = jax.block_until_ready(
        my_supcon_loss(feats2, labels2, target_labels=tl2, fast=False))
    assert jnp.allclose(out2_exact, ref2, rtol=1e-4, atol=1e-4), (out2_exact, ref2)
    out2_stream = jax.block_until_ready(
        my_supcon_loss(feats2, labels2, target_labels=tl2, fast=True,
                       contrast_resident=False))
    assert jnp.allclose(out2_stream, ref2, rtol=5e-2, atol=5e-2), (out2_stream, ref2)

    print("KERNEL_OK")
</pallas_src>

<mosaic_0001>
module attributes {stable_mosaic.version = 11 : i64} {
  func.func @_supcon_kernel(%arg0: i32, %arg1: i32, %arg2: memref<128x128xf32, #tpu.memory_space<vmem>>, %arg3: memref<128x128xf32, #tpu.memory_space<vmem>>, %arg4: memref<1x128xi32, #tpu.memory_space<vmem>>, %arg5: memref<128x1xi32, #tpu.memory_space<vmem>>, %arg6: memref<1x128xf32, #tpu.memory_space<vmem>>, %arg7: memref<1x128xf32, #tpu.memory_space<vmem>>, %arg8: memref<1x128xf32, #tpu.memory_space<vmem>>, %arg9: memref<1x128xf32, #tpu.memory_space<vmem>>, %arg10: memref<1x128xf32, #tpu.memory_space<vmem>>) attributes {dimension_semantics = [#tpu.dimension_semantics<parallel>, #tpu.dimension_semantics<arbitrary>], iteration_bounds = array<i64: 1, 1>, scalar_prefetch = 0 : i64, scratch_operands = 4 : i64, tpu.core_type = #tpu.core_type<tc>, window_params = [{transform_indices = @transform_0, window_bounds = array<i64: 128, 128>}, {pipeline_mode = #tpu.pipeline_mode<synchronous>, transform_indices = @transform_1, window_bounds = array<i64: 128, 128>}, {transform_indices = @transform_2, window_bounds = array<i64: 1, 128>}, {pipeline_mode = #tpu.pipeline_mode<synchronous>, transform_indices = @transform_3, window_bounds = array<i64: 128, 1>}, {transform_indices = @transform_4, window_bounds = array<i64: 1, 128>}]} {
    %c0_i32 = arith.constant 0 : i32
    %0 = arith.cmpi eq, %arg1, %c0_i32 : i32
    %1 = arith.extui %0 : i1 to i32
    %c0_i32_0 = arith.constant 0 : i32
    %2 = arith.cmpi ne, %1, %c0_i32_0 : i32
    scf.if %2 {
      %cst_17 = arith.constant 0xFF800000 : f32
      %36 = vector.broadcast %cst_17 : f32 to vector<1x128xf32>
      %c0_18 = arith.constant 0 : index
      %c0_19 = arith.constant 0 : index
      %37 = vector.load %arg7[%c0_18, %c0_19] : memref<1x128xf32, #tpu.memory_space<vmem>>, vector<1x128xf32>
      tpu.vector_store %arg7[%c0_18, %c0_19], %36 {strides = array<i32>} : memref<1x128xf32, #tpu.memory_space<vmem>>, vector<1x128xf32>,
      %cst_20 = arith.constant 0.000000e+00 : f32
      %38 = vector.broadcast %cst_20 : f32 to vector<1x128xf32>
      %c0_21 = arith.constant 0 : index
      %c0_22 = arith.constant 0 : index
      %39 = vector.load %arg8[%c0_21, %c0_22] : memref<1x128xf32, #tpu.memory_space<vmem>>, vector<1x128xf32>
      tpu.vector_store %arg8[%c0_21, %c0_22], %38 {strides = array<i32>} : memref<1x128xf32, #tpu.memory_space<vmem>>, vector<1x128xf32>,
      %cst_23 = arith.constant 0.000000e+00 : f32
      %40 = vector.broadcast %cst_23 : f32 to vector<1x128xf32>
      %c0_24 = arith.constant 0 : index
      %c0_25 = arith.constant 0 : index
      %41 = vector.load %arg9[%c0_24, %c0_25] : memref<1x128xf32, #tpu.memory_space<vmem>>, vector<1x128xf32>
      tpu.vector_store %arg9[%c0_24, %c0_25], %40 {strides = array<i32>} : memref<1x128xf32, #tpu.memory_space<vmem>>, vector<1x128xf32>,
      %cst_26 = arith.constant 0.000000e+00 : f32
      %42 = vector.broadcast %cst_26 : f32 to vector<1x128xf32>
      %c0_27 = arith.constant 0 : index
      %c0_28 = arith.constant 0 : index
      %43 = vector.load %arg10[%c0_27, %c0_28] : memref<1x128xf32, #tpu.memory_space<vmem>>, vector<1x128xf32>
      tpu.vector_store %arg10[%c0_27, %c0_28], %42 {strides = array<i32>} : memref<1x128xf32, #tpu.memory_space<vmem>>, vector<1x128xf32>,
    } else {
    }
    %c128_i32 = arith.constant 128 : i32
    %3 = arith.muli %arg1, %c128_i32 : i32
    %4 = tpu.assume_multiple %3, 128 : i32
    %5 = arith.index_cast %4 : i32 to index
    %c0 = arith.constant 0 : index
    %6 = vector.load %arg3[%5, %c0] : memref<128x128xf32, #tpu.memory_space<vmem>>, vector<128x128xf32>
    %7 = arith.index_cast %4 : i32 to index
    %c0_1 = arith.constant 0 : index
    %8 = vector.load %arg5[%7, %c0_1] : memref<128x1xi32, #tpu.memory_space<vmem>>, vector<128x1xi32>
    %c0_2 = arith.constant 0 : index
    %c0_3 = arith.constant 0 : index
    %9 = vector.load %arg2[%c0_2, %c0_3] : memref<128x128xf32, #tpu.memory_space<vmem>>, vector<128x128xf32>
    %c0_4 = arith.constant 0 : index
    %c0_5 = arith.constant 0 : index
    %10 = vector.load %arg4[%c0_4, %c0_5] : memref<1x128xi32, #tpu.memory_space<vmem>>, vector<1x128xi32>
    %cst = arith.constant dense<0.000000e+00> : vector<128x128xf32>
    %11 = tpu.matmul %6, %9, %cst {dimension_numbers = #tpu.dot_dimension_numbers<[1], [1], [0], [0], [0, 0, 1, 0], [], []>} : vector<128x128xf32>, vector<128x128xf32>, vector<128x128xf32> -> vector<128x128xf32>
    %12 = vector.broadcast %8 : vector<128x1xi32> to vector<128x128xi32>
    %13 = vector.broadcast %10 : vector<1x128xi32> to vector<128x128xi32>
    %14 = arith.cmpi eq, %12, %13 : vector<128x128xi32>
    %c128_i32_6 = arith.constant 128 : i32
    %15 = arith.muli %arg1, %c128_i32_6 : i32
    %c1_i32 = arith.constant 1 : i32
    %16 = arith.addi %arg0, %c1_i32 : i32
    %c128_i32_7 = arith.constant 128 : i32
    %17 = arith.muli %16, %c128_i32_7 : i32
    %18 = arith.cmpi slt, %15, %17 : i32
    %c1_i32_8 = arith.constant 1 : i32
    %19 = arith.addi %arg1, %c1_i32_8 : i32
    %c128_i32_9 = arith.constant 128 : i32
    %20 = arith.muli %19, %c128_i32_9 : i32
    %c128_i32_10 = arith.constant 128 : i32
    %21 = arith.muli %arg0, %c128_i32_10 : i32
    %22 = arith.cmpi sgt, %20, %21 : i32
    %23 = arith.andi %18, %22 : i1
    %c1_i32_11 = arith.constant 1 : i32
    %24 = arith.addi %arg1, %c1_i32_11 : i32
    %c128_i32_12 = arith.constant 128 : i32
    %25 = arith.muli %24, %c128_i32_12 : i32
    %c16_i32 = arith.constant 16 : i32
    %26 = arith.cmpi sgt, %25, %c16_i32 : i32
    %27 = arith.ori %23, %26 : i1
    %true = arith.constant true
    %28 = arith.xori %27, %true : i1
    %29 = arith.extui %28 : i1 to i32
    %c0_i32_13 = arith.constant 0 : i32
    %30 = arith.cmpi ne, %29, %c0_i32_13 : i32
    scf.if %30 {
      %c0_17 = arith.constant 0 : index
      %c0_18 = arith.constant 0 : index
      %36 = vector.load %arg7[%c0_17, %c0_18] : memref<1x128xf32, #tpu.memory_space<vmem>>, vector<1x128xf32>
      %cst_19 = arith.constant dense<0xFF800000> : vector<128xf32>
      %37 = vector.multi_reduction <maximumf>, %11, %cst_19 [0] : vector<128x128xf32> to vector<128xf32>
      %38 = vector.shape_cast %37 : vector<128xf32> to vector<1x128xf32>
      %39 = arith.maximumf %36, %38 : vector<1x128xf32>
      %40 = arith.subf %36, %39 : vector<1x128xf32>
      %41 = math.exp %40 : vector<1x128xf32>
      %42 = vector.broadcast %39 : vector<1x128xf32> to vector<128x128xf32>
      %43 = arith.subf %11, %42 : vector<128x128xf32>
      %44 = math.exp %43 : vector<128x128xf32>
      %c0_20 = arith.constant 0 : index
      %c0_21 = arith.constant 0 : index
      %45 = vector.load %arg8[%c0_20, %c0_21] : memref<1x128xf32, #tpu.memory_space<vmem>>, vector<1x128xf32>
      %46 = arith.mulf %41, %45 : vector<1x128xf32>
      %cst_22 = arith.constant dense<0.000000e+00> : vector<128xf32>
      %47 = vector.multi_reduction <add>, %44, %cst_22 [0] : vector<128x128xf32> to vector<128xf32>
      %48 = vector.shape_cast %47 : vector<128xf32> to vector<1x128xf32>
      %49 = arith.addf %46, %48 : vector<1x128xf32>
      %c0_23 = arith.constant 0 : index
      %c0_24 = arith.constant 0 : index
      %50 = vector.load %arg8[%c0_23, %c0_24] : memref<1x128xf32, #tpu.memory_space<vmem>>, vector<1x128xf32>
      tpu.vector_store %arg8[%c0_23, %c0_24], %49 {strides = array<i32>} : memref<1x128xf32, #tpu.memory_space<vmem>>, vector<1x128xf32>,
      %c0_25 = arith.constant 0 : index
      %c0_26 = arith.constant 0 : index
      %51 = vector.load %arg7[%c0_25, %c0_26] : memref<1x128xf32, #tpu.memory_space<vmem>>, vector<1x128xf32>
      tpu.vector_store %arg7[%c0_25, %c0_26], %39 {strides = array<i32>} : memref<1x128xf32, #tpu.memory_space<vmem>>, vector<1x128xf32>,
      %52 = arith.extui %14 : vector<128x128xi1> to vector<128x128xi32>
      %53 = arith.sitofp %52 : vector<128x128xi32> to vector<128x128xf32>
      %c0_27 = arith.constant 0 : index
      %c0_28 = arith.constant 0 : index
      %54 = vector.load %arg9[%c0_27, %c0_28] : memref<1x128xf32, #tpu.memory_space<vmem>>, vector<1x128xf32>
      %55 = arith.mulf %53, %11 : vector<128x128xf32>
      %cst_29 = arith.constant dense<0.000000e+00> : vector<128xf32>
      %56 = vector.multi_reduction <add>, %55, %cst_29 [0] : vector<128x128xf32> to vector<128xf32>
      %57 = vector.shape_cast %56 : vector<128xf32> to vector<1x128xf32>
      %58 = arith.addf %54, %57 : vector<1x128xf32>
      %c0_30 = arith.constant 0 : index
      %c0_31 = arith.constant 0 : index
      %59 = vector.load %arg9[%c0_30, %c0_31] : memref<1x128xf32, #tpu.memory_space<vmem>>, vector<1x128xf32>
      tpu.vector_store %arg9[%c0_30, %c0_31], %58 {strides = array<i32>} : memref<1x128xf32, #tpu.memory_space<vmem>>, vector<1x128xf32>,
      %c0_32 = arith.constant 0 : index
      %c0_33 = arith.constant 0 : index
      %60 = vector.load %arg10[%c0_32, %c0_33] : memref<1x128xf32, #tpu.memory_space<vmem>>, vector<1x128xf32>
      %cst_34 = arith.constant dense<0.000000e+00> : vector<128xf32>
      %61 = vector.multi_reduction <add>, %53, %cst_34 [0] : vector<128x128xf32> to vector<128xf32>
      %62 = vector.shape_cast %61 : vector<128xf32> to vector<1x128xf32>
      %63 = arith.addf %60, %62 : vector<1x128xf32>
      %c0_35 = arith.constant 0 : index
      %c0_36 = arith.constant 0 : index
      %64 = vector.load %arg10[%c0_35, %c0_36] : memref<1x128xf32, #tpu.memory_space<vmem>>, vector<1x128xf32>
      tpu.vector_store %arg10[%c0_35, %c0_36], %63 {strides = array<i32>} : memref<1x128xf32, #tpu.memory_space<vmem>>, vector<1x128xf32>,
    } else {
    }
    %31 = arith.extui %27 : i1 to i32
    %c0_i32_14 = arith.constant 0 : i32
    %32 = arith.cmpi ne, %31, %c0_i32_14 : i32
    scf.if %32 {
      %c128_i32_17 = arith.constant 128 : i32
      %36 = arith.muli %arg1, %c128_i32_17 : i32
      %37 = tpu.iota {dimensions = array<i32: 0>} : vector<128x1xi32>
      %38 = vector.broadcast %36 : i32 to vector<128x1xi32>
      %39 = arith.addi %38, %37 : vector<128x1xi32>
      %c128_i32_18 = arith.constant 128 : i32
      %40 = arith.muli %arg0, %c128_i32_18 : i32
      %41 = tpu.iota {dimensions = array<i32: 1>} : vector<1x128xi32>
      %42 = vector.broadcast %40 : i32 to vector<1x128xi32>
      %43 = arith.addi %42, %41 : vector<1x128xi32>
      %44 = vector.broadcast %39 : vector<128x1xi32> to vector<128x128xi32>
      %45 = vector.broadcast %43 : vector<1x128xi32> to vector<128x128xi32>
      %46 = arith.cmpi eq, %44, %45 : vector<128x128xi32>
      %c16_i32_19 = arith.constant 16 : i32
      %47 = vector.broadcast %c16_i32_19 : i32 to vector<128x1xi32>
      %48 = arith.cmpi sge, %39, %47 : vector<128x1xi32>
      %49 = vector.broadcast %48 : vector<128x1xi1> to vector<128x128xi1>
      %50 = arith.ori %46, %49 : vector<128x128xi1>
      %cst_20 = arith.constant -1.000000e+30 : f32
      %51 = vector.broadcast %cst_20 : f32 to vector<128x128xf32>
      %52 = arith.select %50, %51, %11 : vector<128x128xi1>, vector<128x128xf32>
      %cst_21 = arith.constant dense<true> : vector<128x128xi1>
      %53 = arith.xori %50, %cst_21 : vector<128x128xi1>
      %54 = arith.andi %14, %53 : vector<128x128xi1>
      %c0_22 = arith.constant 0 : index
      %c0_23 = arith.constant 0 : index
      %55 = vector.load %arg7[%c0_22, %c0_23] : memref<1x128xf32, #tpu.memory_space<vmem>>, vector<1x128xf32>
      %cst_24 = arith.constant dense<0xFF800000> : vector<128xf32>
      %56 = vector.multi_reduction <maximumf>, %52, %cst_24 [0] : vector<128x128xf32> to vector<128xf32>
      %57 = vector.shape_cast %56 : vector<128xf32> to vector<1x128xf32>
      %58 = arith.maximumf %55, %57 : vector<1x128xf32>
      %59 = arith.subf %55, %58 : vector<1x128xf32>
      %60 = math.exp %59 : vector<1x128xf32>
      %61 = vector.broadcast %58 : vector<1x128xf32> to vector<128x128xf32>
      %62 = arith.subf %52, %61 : vector<128x128xf32>
      %63 = math.exp %62 : vector<128x128xf32>
      %c0_25 = arith.constant 0 : index
      %c0_26 = arith.constant 0 : index
      %64 = vector.load %arg8[%c0_25, %c0_26] : memref<1x128xf32, #tpu.memory_space<vmem>>, vector<1x128xf32>
      %65 = arith.mulf %60, %64 : vector<1x128xf32>
      %cst_27 = arith.constant dense<0.000000e+00> : vector<128xf32>
      %66 = vector.multi_reduction <add>, %63, %cst_27 [0] : vector<128x128xf32> to vector<128xf32>
      %67 = vector.shape_cast %66 : vector<128xf32> to vector<1x128xf32>
      %68 = arith.addf %65, %67 : vector<1x128xf32>
      %c0_28 = arith.constant 0 : index
      %c0_29 = arith.constant 0 : index
      %69 = vector.load %arg8[%c0_28, %c0_29] : memref<1x128xf32, #tpu.memory_space<vmem>>, vector<1x128xf32>
      tpu.vector_store %arg8[%c0_28, %c0_29], %68 {strides = array<i32>} : memref<1x128xf32, #tpu.memory_space<vmem>>, vector<1x128xf32>,
      %c0_30 = arith.constant 0 : index
      %c0_31 = arith.constant 0 : index
      %70 = vector.load %arg7[%c0_30, %c0_31] : memref<1x128xf32, #tpu.memory_space<vmem>>, vector<1x128xf32>
      tpu.vector_store %arg7[%c0_30, %c0_31], %58 {strides = array<i32>} : memref<1x128xf32, #tpu.memory_space<vmem>>, vector<1x128xf32>,
      %71 = arith.extui %54 : vector<128x128xi1> to vector<128x128xi32>
      %72 = arith.sitofp %71 : vector<128x128xi32> to vector<128x128xf32>
      %c0_32 = arith.constant 0 : index
      %c0_33 = arith.constant 0 : index
      %73 = vector.load %arg9[%c0_32, %c0_33] : memref<1x128xf32, #tpu.memory_space<vmem>>, vector<1x128xf32>
      %74 = arith.mulf %72, %52 : vector<128x128xf32>
      %cst_34 = arith.constant dense<0.000000e+00> : vector<128xf32>
      %75 = vector.multi_reduction <add>, %74, %cst_34 [0] : vector<128x128xf32> to vector<128xf32>
      %76 = vector.shape_cast %75 : vector<128xf32> to vector<1x128xf32>
      %77 = arith.addf %73, %76 : vector<1x128xf32>
      %c0_35 = arith.constant 0 : index
      %c0_36 = arith.constant 0 : index
      %78 = vector.load %arg9[%c0_35, %c0_36] : memref<1x128xf32, #tpu.memory_space<vmem>>, vector<1x128xf32>
      tpu.vector_store %arg9[%c0_35, %c0_36], %77 {strides = array<i32>} : memref<1x128xf32, #tpu.memory_space<vmem>>, vector<1x128xf32>,
      %c0_37 = arith.constant 0 : index
      %c0_38 = arith.constant 0 : index
      %79 = vector.load %arg10[%c0_37, %c0_38] : memref<1x128xf32, #tpu.memory_space<vmem>>, vector<1x128xf32>
      %cst_39 = arith.constant dense<0.000000e+00> : vector<128xf32>
      %80 = vector.multi_reduction <add>, %72, %cst_39 [0] : vector<128x128xf32> to vector<128xf32>
      %81 = vector.shape_cast %80 : vector<128xf32> to vector<1x128xf32>
      %82 = arith.addf %79, %81 : vector<1x128xf32>
      %c0_40 = arith.constant 0 : index
      %c0_41 = arith.constant 0 : index
      %83 = vector.load %arg10[%c0_40, %c0_41] : memref<1x128xf32, #tpu.memory_space<vmem>>, vector<1x128xf32>
      tpu.vector_store %arg10[%c0_40, %c0_41], %82 {strides = array<i32>} : memref<1x128xf32, #tpu.memory_space<vmem>>, vector<1x128xf32>,
    } else {
    }
    %c0_i32_15 = arith.constant 0 : i32
    %33 = arith.cmpi eq, %arg1, %c0_i32_15 : i32
    %34 = arith.extui %33 : i1 to i32
    %c0_i32_16 = arith.constant 0 : i32
    %35 = arith.cmpi ne, %34, %c0_i32_16 : i32
    scf.if %35 {
      %c0_17 = arith.constant 0 : index
      %c0_18 = arith.constant 0 : index
      %36 = vector.load %arg7[%c0_17, %c0_18] : memref<1x128xf32, #tpu.memory_space<vmem>>, vector<1x128xf32>
      %c0_19 = arith.constant 0 : index
      %c0_20 = arith.constant 0 : index
      %37 = vector.load %arg8[%c0_19, %c0_20] : memref<1x128xf32, #tpu.memory_space<vmem>>, vector<1x128xf32>
      %38 = math.log %37 : vector<1x128xf32>
      %39 = arith.addf %36, %38 : vector<1x128xf32>
      %c0_21 = arith.constant 0 : index
      %c0_22 = arith.constant 0 : index
      %40 = vector.load %arg9[%c0_21, %c0_22] : memref<1x128xf32, #tpu.memory_space<vmem>>, vector<1x128xf32>
      %c0_23 = arith.constant 0 : index
      %c0_24 = arith.constant 0 : index
      %41 = vector.load %arg10[%c0_23, %c0_24] : memref<1x128xf32, #tpu.memory_space<vmem>>, vector<1x128xf32>
      %42 = arith.divf %40, %41 : vector<1x128xf32>
      %43 = arith.subf %42, %39 : vector<1x128xf32>
      %cst_25 = arith.constant -1.000000e+00 : f32
      %44 = vector.broadcast %cst_25 : f32 to vector<1x128xf32>
      %45 = arith.mulf %44, %43 : vector<1x128xf32>
      %c0_26 = arith.constant 0 : index
      %c0_27 = arith.constant 0 : index
      %46 = vector.load %arg6[%c0_26, %c0_27] : memref<1x128xf32, #tpu.memory_space<vmem>>, vector<1x128xf32>
      tpu.vector_store %arg6[%c0_26, %c0_27], %45 {strides = array<i32>} : memref<1x128xf32, #tpu.memory_space<vmem>>, vector<1x128xf32>,
    } else {
    }
    return
  }
  func.func @transform_0(%arg0: i32, %arg1: i32) -> (i32, i32) {
    %c0_i32 = arith.constant 0 : i32
    %c0_i32_0 = arith.constant 0 : i32
    return %arg0, %c0_i32 : i32, i32
  }
  func.func @transform_1(%arg0: i32, %arg1: i32) -> (i32, i32) {
    %c0_i32 = arith.constant 0 : i32
    %c0_i32_0 = arith.constant 0 : i32
    %c0_i32_1 = arith.constant 0 : i32
    return %c0_i32, %c0_i32_0 : i32, i32
  }
  func.func @transform_2(%arg0: i32, %arg1: i32) -> (i32, i32) {
    %c0_i32 = arith.constant 0 : i32
    %c0_i32_0 = arith.constant 0 : i32
    return %c0_i32, %arg0 : i32, i32
  }
  func.func @transform_3(%arg0: i32, %arg1: i32) -> (i32, i32) {
    %c0_i32 = arith.constant 0 : i32
    %c0_i32_0 = arith.constant 0 : i32
    %c0_i32_1 = arith.constant 0 : i32
    return %c0_i32, %c0_i32_0 : i32, i32
  }
  func.func @transform_4(%arg0: i32, %arg1: i32) -> (i32, i32) {
    %c0_i32 = arith.constant 0 : i32
    %c0_i32_0 = arith.constant 0 : i32
    return %c0_i32, %arg0 : i32, i32
  }
}

</mosaic_0001>

<llo_original>
// kernel: tpu_custom_call.1
$region0: #{tpu_custom_call.1}
  #allocation0 [shape = 'u32[]', space=smem, size = 0x4, offset = 0x4, fixed_abs, tag = 'smem constant byte address 0x4 - core index']
  #allocation1 [shape = 'u32[144,128]{1,0:T(1,128)}', space=vmem, size = 0x12000, scoped, tag = 'internal scratch']
  #allocation2 [shape = 'f32[1,128]{1,0:T(1,128)}', space=vmem, size = 0x200, scoped, tag = 'scratch operand']
  #allocation3 [shape = 'f32[1,128]{1,0:T(1,128)}', space=vmem, size = 0x200, scoped, tag = 'scratch operand']
  #allocation4 [shape = 'f32[1,128]{1,0:T(1,128)}', space=vmem, size = 0x200, scoped, tag = 'scratch operand']
  #allocation5 [shape = 'f32[1,128]{1,0:T(1,128)}', space=vmem, size = 0x200, scoped, tag = 'scratch operand']
  %s0 = inlined_call_operand.vmem [shape: f32[128,128], index: 0, kind: input, shape index: {}]
  %s1 = inlined_call_operand.hbm [shape: f32[128,128], index: 1, kind: input, shape index: {}]
  %s2 = inlined_call_operand.vmem [shape: s32[1,128], index: 2, kind: input, shape index: {}]
  %s3 = inlined_call_operand.vmem [shape: s32[128,1], index: 3, kind: input, shape index: {}]
  %s4 = inlined_call_operand.hbm [shape: f32[1,128], index: 4, kind: output, shape index: {}]
  %s5 = sld [smem:[#allocation0]]
  $region46: #{tpu_custom_call.1} parent=0
    _
  %s7 = ssub.s32 1, %s5
  %s8 = scalar_select 0, %s7, %s5
  $region1: #{tpu_custom_call.1} parent=0
    #allocation6 [shape = 'u8[65536]{0}', space=vmem, size = 0x10000, scoped, tag = 'input window, operand 1, single buffered']
    #allocation7 [shape = 's32[1]{0}', space=sflag, size = 0x4, scoped, tag = 'scoped memory for tpu_custom_call.1']
    #allocation8 [shape = 's32[1]{0}', space=sflag, size = 0x4, scoped, tag = 'scoped memory for tpu_custom_call.1']
    #allocation9 [shape = 'u8[512]{0}', space=vmem, size = 0x400, scoped, tag = 'output window, operand 0, single buffered']
    %9 = vsyncpa [#allocation7], 0
    %10 = vsyncpa [#allocation8], 0
    // Predicated region
    $region2: #{tpu_custom_call.1} parent=1 // pred_check
      _
    $region3: #{tpu_custom_call.1} parent=1 // pred_check_branch
      %12 = sbr.rel (0) target = $region5
    $region4: #{tpu_custom_call.1} parent=1 // pred_region
      _
    $region5: #{tpu_custom_call.1} parent=1 // pred_fallthru
      _
    // Predicated region
    $region6: #{tpu_custom_call.1} parent=1 // pred_check
      _
    $region7: #{tpu_custom_call.1} parent=1 // pred_check_branch
      %14 = sbr.rel (0) target = $region9
    $region8: #{tpu_custom_call.1} parent=1 // pred_region
      %s16 = ssub.s32 2048, 2048
      %17 = vsyncadd [#allocation7], %s16
      %s18 = sshll.u32 [#allocation6], 4
      %s19 = int_to_ptr.vmem [resolvable:$true] %s18
      %24 = dma.hbm_to_vmem [thread:$0]  %s1, 2048, %s19, [#allocation7], 128, 128, 8
    $region9: #{tpu_custom_call.1} parent=1 // pred_fallthru
      _
    // Predicated region
    $region10: #{tpu_custom_call.1} parent=1 // pred_check
      _
    $region11: #{tpu_custom_call.1} parent=1 // pred_check_branch
      %26 = sbr.rel (0) target = $region13
    $region12: #{tpu_custom_call.1} parent=1 // pred_region
      _
    $region13: #{tpu_custom_call.1} parent=1 // pred_fallthru
      _
    // Predicated region
    $region14: #{tpu_custom_call.1} parent=1 // pred_check
      _
    $region15: #{tpu_custom_call.1} parent=1 // pred_check_branch
      %28 = sbr.rel (0) target = $region17
    $region16: #{tpu_custom_call.1} parent=1 // pred_region
      _
    $region17: #{tpu_custom_call.1} parent=1 // pred_fallthru
      _
    // Predicated region
    $region18: #{tpu_custom_call.1} parent=1 // pred_check
      _
    $region19: #{tpu_custom_call.1} parent=1 // pred_check_branch
      %30 = sbr.rel (0) target = $region21
    $region20: #{tpu_custom_call.1} parent=1 // pred_region
      %31 = dma.done [#allocation7], 2048
    $region21: #{tpu_custom_call.1} parent=1 // pred_fallthru
      _
    %p32 = scmp.eq.s32.totalorder 0, 0
    // Predicated region
    $region22: #{tpu_custom_call.1} parent=1 // pred_check
      %p33 = pneg %p32
    $region23: #{tpu_custom_call.1} parent=1 // pred_check_branch
      %35 = sbr.rel (%p33) target = $region25
    $region24: #{tpu_custom_call.1} parent=1 // pred_region
      %36 = vst [vmem:[#allocation2] sm:$0x1] -inf
      %37 = vst [vmem:[#allocation3] sm:$0x1] 0.0
      %38 = vst [vmem:[#allocation4] sm:$0x1] 0.0
      %39 = vst [vmem:[#allocation5] sm:$0x1] 0.0
    $region25: #{tpu_custom_call.1} parent=1 // pred_fallthru
      _
    %s40 = smul.u32 0, 128
    %s41 = scalar_lea.vmem [#allocation6], %s40
    %v42 = vld [vmem:[%s41] sm:$0xff]
    %v43 = vld [vmem:[%s41 + $0x8] sm:$0xff]
    %v44 = vld [vmem:[%s41 + $0x10] sm:$0xff]
    %v45 = vld [vmem:[%s41 + $0x18] sm:$0xff]
    %v46 = vld [vmem:[%s41 + $0x20] sm:$0xff]
    %v47 = vld [vmem:[%s41 + $0x28] sm:$0xff]
    %v48 = vld [vmem:[%s41 + $0x30] sm:$0xff]
    %v49 = vld [vmem:[%s41 + $0x38] sm:$0xff]
    %v50 = vld [vmem:[%s41 + $0x40] sm:$0xff]
    %v51 = vld [vmem:[%s41 + $0x48] sm:$0xff]
    %v52 = vld [vmem:[%s41 + $0x50] sm:$0xff]
    %v53 = vld [vmem:[%s41 + $0x58] sm:$0xff]
    %v54 = vld [vmem:[%s41 + $0x60] sm:$0xff]
    %v55 = vld [vmem:[%s41 + $0x68] sm:$0xff]
    %v56 = vld [vmem:[%s41 + $0x70] sm:$0xff]
    %v57 = vld [vmem:[%s41 + $0x78] sm:$0xff]
    %s58 = scalar_lea.vmem %s3, %s40
    %v59 = vld [vmem:[%s58] sm:$0xff]
    %v60 = vld [vmem:[%s58 + $0x8] sm:$0xff]
    %v61 = vld [vmem:[%s58 + $0x10] sm:$0xff]
    %v62 = vld [vmem:[%s58 + $0x18] sm:$0xff]
    %v63 = vld [vmem:[%s58 + $0x20] sm:$0xff]
    %v64 = vld [vmem:[%s58 + $0x28] sm:$0xff]
    %v65 = vld [vmem:[%s58 + $0x30] sm:$0xff]
    %v66 = vld [vmem:[%s58 + $0x38] sm:$0xff]
    %v67 = vld [vmem:[%s58 + $0x40] sm:$0xff]
    %v68 = vld [vmem:[%s58 + $0x48] sm:$0xff]
    %v69 = vld [vmem:[%s58 + $0x50] sm:$0xff]
    %v70 = vld [vmem:[%s58 + $0x58] sm:$0xff]
    %v71 = vld [vmem:[%s58 + $0x60] sm:$0xff]
    %v72 = vld [vmem:[%s58 + $0x68] sm:$0xff]
    %v73 = vld [vmem:[%s58 + $0x70] sm:$0xff]
    %v74 = vld [vmem:[%s58 + $0x78] sm:$0xff]
    %v75 = vld [vmem:[%s0] sm:$0xff]
    %v76 = vld [vmem:[%s0 + $0x8] sm:$0xff]
    %v77 = vld [vmem:[%s0 + $0x10] sm:$0xff]
    %v78 = vld [vmem:[%s0 + $0x18] sm:$0xff]
    %v79 = vld [vmem:[%s0 + $0x20] sm:$0xff]
    %v80 = vld [vmem:[%s0 + $0x28] sm:$0xff]
    %v81 = vld [vmem:[%s0 + $0x30] sm:$0xff]
    %v82 = vld [vmem:[%s0 + $0x38] sm:$0xff]
    %v83 = vld [vmem:[%s0 + $0x40] sm:$0xff]
    %v84 = vld [vmem:[%s0 + $0x48] sm:$0xff]
    %v85 = vld [vmem:[%s0 + $0x50] sm:$0xff]
    %v86 = vld [vmem:[%s0 + $0x58] sm:$0xff]
    %v87 = vld [vmem:[%s0 + $0x60] sm:$0xff]
    %v88 = vld [vmem:[%s0 + $0x68] sm:$0xff]
    %v89 = vld [vmem:[%s0 + $0x70] sm:$0xff]
    %v90 = vld [vmem:[%s0 + $0x78] sm:$0xff]
    %v91 = vld [vmem:[%s2] sm:$0x1]
    %92 = vmatprep.subr.mxu0 0.0
    %93 = vmatpush1.xpose.msra.mxu0 %v75
    %94 = vmatprep.subr.mxu0 0.0
    %95 = vmatpush1.xpose.msra.mxu0 %v76
    %96 = vmatprep.subr.mxu0 0.0
    %97 = vmatpush1.xpose.msra.mxu0 %v77
    %98 = vmatprep.subr.mxu0 0.0
    %99 = vmatpush1.xpose.msra.mxu0 %v78
    %100 = vmatprep.subr.mxu0 0.0
    %101 = vmatpush1.xpose.msra.mxu0 %v79
    %102 = vmatprep.subr.mxu0 0.0
    %103 = vmatpush1.xpose.msra.mxu0 %v80
    %104 = vmatprep.subr.mxu0 0.0
    %105 = vmatpush1.xpose.msra.mxu0 %v81
    %106 = vmatprep.subr.mxu0 0.0
    %107 = vmatpush1.xpose.msra.mxu0 %v82
    %108 = vmatprep.subr.mxu0 0.0
    %109 = vmatpush1.xpose.msra.mxu0 %v83
    %110 = vmatprep.subr.mxu0 0.0
    %111 = vmatpush1.xpose.msra.mxu0 %v84
    %112 = vmatprep.subr.mxu0 0.0
    %113 = vmatpush1.xpose.msra.mxu0 %v85
    %114 = vmatprep.subr.mxu0 0.0
    %115 = vmatpush1.xpose.msra.mxu0 %v86
    %116 = vmatprep.subr.mxu0 0.0
    %117 = vmatpush1.xpose.msra.mxu0 %v87
    %118 = vmatprep.subr.mxu0 0.0
    %119 = vmatpush1.xpose.msra.mxu0 %v88
    %120 = vmatprep.subr.mxu0 0.0
    %121 = vmatpush1.xpose.msra.mxu0 %v89
    %122 = vmatprep.subr.mxu0 0.0
    %123 = vmatpush1.xpose.msra.mxu0 %v90
    %124 = vmatprep.subr.mxu0 0.0
    %125 = vmatpush1.xpose.msra.mxu0 0.0
    %126 = vmatprep.subr.mxu0 0.0
    %127 = vmatpush1.xpose.msra.mxu0 0.0
    %128 = vmatprep.subr.mxu0 0.0
    %129 = vmatpush1.xpose.msra.mxu0 0.0
    %130 = vmatprep.subr.mxu0 0.0
    %131 = vmatpush1.xpose.msra.mxu0 0.0
    %132 = vmatprep.subr.mxu0 0.0
    %133 = vmatpush1.xpose.msra.mxu0 0.0
    %134 = vmatprep.subr.mxu0 0.0
    %135 = vmatpush1.xpose.msra.mxu0 0.0
    %136 = vmatprep.subr.mxu0 0.0
    %137 = vmatpush1.xpose.msra.mxu0 0.0
    %138 = vmatprep.subr.mxu0 0.0
    %139 = vmatpush1.xpose.msra.mxu0 0.0
    %140 = vmatprep.subr.mxu0 0.0
    %141 = vmatpush1.xpose.msra.mxu0 0.0
    %142 = vmatprep.subr.mxu0 0.0
    %143 = vmatpush1.xpose.msra.mxu0 0.0
    %144 = vmatprep.subr.mxu0 0.0
    %145 = vmatpush1.xpose.msra.mxu0 0.0
    %146 = vmatprep.subr.mxu0 0.0
    %147 = vmatpush1.xpose.msra.mxu0 0.0
    %148 = vmatprep.subr.mxu0 0.0
    %149 = vmatpush1.xpose.msra.mxu0 0.0
    %150 = vmatprep.subr.mxu0 0.0
    %151 = vmatpush1.xpose.msra.mxu0 0.0
    %152 = vmatprep.subr.mxu0 0.0
    %153 = vmatpush1.xpose.msra.mxu0 0.0
    %154 = vmatprep.subr.mxu0 0.0
    %155 = vmatpush1.xpose.msra.mxu0 0.0
    %156 = vmatprep.mubr.f32.mxu0 0.0
    %157 = vmatmul.mubr.f32.gmra.mrb[0].mxu0 %v42
    %v158 = vpop.f32.mrb[0].mxu0
    %v159 = vadd.f32 0.0, %v158
    %v160 = vpop.f32.mrb[0].mxu0
    %161 = vmatprep.mubr.f32.mxu0 0.0
    %162 = vmatmul.mubr.f32.gmra.mrb[0].mxu0 %v43
    %v163 = vpop.f32.mrb[0].mxu0
    %v164 = vadd.f32 0.0, %v163
    %v165 = vpop.f32.mrb[0].mxu0
    %166 = vmatprep.mubr.f32.mxu0 0.0
    %167 = vmatmul.mubr.f32.gmra.mrb[0].mxu0 %v44
    %v168 = vpop.f32.mrb[0].mxu0
    %v169 = vadd.f32 0.0, %v168
    %v170 = vpop.f32.mrb[0].mxu0
    %171 = vmatprep.mubr.f32.mxu0 0.0
    %172 = vmatmul.mubr.f32.gmra.mrb[0].mxu0 %v45
    %v173 = vpop.f32.mrb[0].mxu0
    %v174 = vadd.f32 0.0, %v173
    %v175 = vpop.f32.mrb[0].mxu0
    %176 = vmatprep.mubr.f32.mxu0 0.0
    %177 = vmatmul.mubr.f32.gmra.mrb[0].mxu0 %v46
    %v178 = vpop.f32.mrb[0].mxu0
    %v179 = vadd.f32 0.0, %v178
    %v180 = vpop.f32.mrb[0].mxu0
    %181 = vmatprep.mubr.f32.mxu0 0.0
    %182 = vmatmul.mubr.f32.gmra.mrb[0].mxu0 %v47
    %v183 = vpop.f32.mrb[0].mxu0
    %v184 = vadd.f32 0.0, %v183
    %v185 = vpop.f32.mrb[0].mxu0
    %186 = vmatprep.mubr.f32.mxu0 0.0
    %187 = vmatmul.mubr.f32.gmra.mrb[0].mxu0 %v48
    %v188 = vpop.f32.mrb[0].mxu0
    %v189 = vadd.f32 0.0, %v188
    %v190 = vpop.f32.mrb[0].mxu0
    %191 = vmatprep.mubr.f32.mxu0 0.0
    %192 = vmatmul.mubr.f32.gmra.mrb[0].mxu0 %v49
    %v193 = vpop.f32.mrb[0].mxu0
    %v194 = vadd.f32 0.0, %v193
    %v195 = vpop.f32.mrb[0].mxu0
    %196 = vmatprep.mubr.f32.mxu0 0.0
    %197 = vmatmul.mubr.f32.gmra.mrb[0].mxu0 %v50
    %v198 = vpop.f32.mrb[0].mxu0
    %v199 = vadd.f32 0.0, %v198
    %v200 = vpop.f32.mrb[0].mxu0
    %201 = vmatprep.mubr.f32.mxu0 0.0
    %202 = vmatmul.mubr.f32.gmra.mrb[0].mxu0 %v51
    %v203 = vpop.f32.mrb[0].mxu0
    %v204 = vadd.f32 0.0, %v203
    %v205 = vpop.f32.mrb[0].mxu0
    %206 = vmatprep.mubr.f32.mxu0 0.0
    %207 = vmatmul.mubr.f32.gmra.mrb[0].mxu0 %v52
    %v208 = vpop.f32.mrb[0].mxu0
    %v209 = vadd.f32 0.0, %v208
    %v210 = vpop.f32.mrb[0].mxu0
    %211 = vmatprep.mubr.f32.mxu0 0.0
    %212 = vmatmul.mubr.f32.gmra.mrb[0].mxu0 %v53
    %v213 = vpop.f32.mrb[0].mxu0
    %v214 = vadd.f32 0.0, %v213
    %v215 = vpop.f32.mrb[0].mxu0
    %216 = vmatprep.mubr.f32.mxu0 0.0
    %217 = vmatmul.mubr.f32.gmra.mrb[0].mxu0 %v54
    %v218 = vpop.f32.mrb[0].mxu0
    %v219 = vadd.f32 0.0, %v218
    %v220 = vpop.f32.mrb[0].mxu0
    %221 = vmatprep.mubr.f32.mxu0 0.0
    %222 = vmatmul.mubr.f32.gmra.mrb[0].mxu0 %v55
    %v223 = vpop.f32.mrb[0].mxu0
    %v224 = vadd.f32 0.0, %v223
    %v225 = vpop.f32.mrb[0].mxu0
    %226 = vmatprep.mubr.f32.mxu0 0.0
    %227 = vmatmul.mubr.f32.gmra.mrb[0].mxu0 %v56
    %v228 = vpop.f32.mrb[0].mxu0
    %v229 = vadd.f32 0.0, %v228
    %v230 = vpop.f32.mrb[0].mxu0
    %231 = vmatprep.mubr.f32.mxu0 0.0
    %232 = vmatmul.mubr.f32.gmra.mrb[0].mxu0 %v57
    %v233 = vpop.f32.mrb[0].mxu0
    %v234 = vadd.f32 0.0, %v233
    %v235 = vpop.f32.mrb[0].mxu0
    %236 = vdwg.mxu0
    %237 = vset.pattern.permute.xlu0 0
    %238 = vperm.xlu0 %237, %v59
    %v239 = vpop.permute.xlu0 %238
    %240 = vset.pattern.permute.xlu0 0
    %241 = vperm.xlu0 %240, %v60
    %v242 = vpop.permute.xlu0 %241
    %243 = vset.pattern.permute.xlu0 0
    %244 = vperm.xlu0 %243, %v61
    %v245 = vpop.permute.xlu0 %244
    %246 = vset.pattern.permute.xlu0 0
    %247 = vperm.xlu0 %246, %v62
    %v248 = vpop.permute.xlu0 %247
    %249 = vset.pattern.permute.xlu0 0
    %250 = vperm.xlu0 %249, %v63
    %v251 = vpop.permute.xlu0 %250
    %252 = vset.pattern.permute.xlu0 0
    %253 = vperm.xlu0 %252, %v64
    %v254 = vpop.permute.xlu0 %253
    %255 = vset.pattern.permute.xlu0 0
    %256 = vperm.xlu0 %255, %v65
    %v257 = vpop.permute.xlu0 %256
    %258 = vset.pattern.permute.xlu0 0
    %259 = vperm.xlu0 %258, %v66
    %v260 = vpop.permute.xlu0 %259
    %261 = vset.pattern.permute.xlu0 0
    %262 = vperm.xlu0 %261, %v67
    %v263 = vpop.permute.xlu0 %262
    %264 = vset.pattern.permute.xlu0 0
    %265 = vperm.xlu0 %264, %v68
    %v266 = vpop.permute.xlu0 %265
    %267 = vset.pattern.permute.xlu0 0
    %268 = vperm.xlu0 %267, %v69
    %v269 = vpop.permute.xlu0 %268
    %270 = vset.pattern.permute.xlu0 0
    %271 = vperm.xlu0 %270, %v70
    %v272 = vpop.permute.xlu0 %271
    %273 = vset.pattern.permute.xlu0 0
    %274 = vperm.xlu0 %273, %v71
    %v275 = vpop.permute.xlu0 %274
    %276 = vset.pattern.permute.xlu0 0
    %277 = vperm.xlu0 %276, %v72
    %v278 = vpop.permute.xlu0 %277
    %279 = vset.pattern.permute.xlu0 0
    %280 = vperm.xlu0 %279, %v73
    %v281 = vpop.permute.xlu0 %280
    %282 = vset.pattern.permute.xlu0 0
    %283 = vperm.xlu0 %282, %v74
    %v284 = vpop.permute.xlu0 %283
    %v285 = vlaneseq
    %v286 = vshrl.u32 %v285, 7
    %v287 = vsub.s32 0, %v286
    %v288 = vrot.slane %v91, %v287
    %vm289 = vcmp.eq.s32.totalorder %v239, %v288
    %vm290 = vcmp.eq.s32.totalorder %v242, %v288
    %vm291 = vcmp.eq.s32.totalorder %v245, %v288
    %vm292 = vcmp.eq.s32.totalorder %v248, %v288
    %vm293 = vcmp.eq.s32.totalorder %v251, %v288
    %vm294 = vcmp.eq.s32.totalorder %v254, %v288
    %vm295 = vcmp.eq.s32.totalorder %v257, %v288
    %vm296 = vcmp.eq.s32.totalorder %v260, %v288
    %vm297 = vcmp.eq.s32.totalorder %v263, %v288
    %vm298 = vcmp.eq.s32.totalorder %v266, %v288
    %vm299 = vcmp.eq.s32.totalorder %v269, %v288
    %vm300 = vcmp.eq.s32.totalorder %v272, %v288
    %vm301 = vcmp.eq.s32.totalorder %v275, %v288
    %vm302 = vcmp.eq.s32.totalorder %v278, %v288
    %vm303 = vcmp.eq.s32.totalorder %v281, %v288
    %vm304 = vcmp.eq.s32.totalorder %v284, %v288
    %s305 = sadd.s32 0, 1
    %s306 = smul.u32 %s305, 128
    %p307 = scmp.lt.s32.totalorder %s40, %s306
    %s308 = sadd.s32 0, 1
    %s309 = smul.u32 %s308, 128
    %s310 = smul.u32 0, 128
    %p311 = scmp.gt.s32.totalorder %s309, %s310
    %p312 = pnand %p307, %p311
    %p313 = pneg %p312
    %p314 = scmp.gt.s32.totalorder %s309, 16
    %p315 = por %p313, %p314
    // Predicated region
    $region26: #{tpu_custom_call.1} parent=1 // pred_check
      %p316 = pneg %p315
    $region27: #{tpu_custom_call.1} parent=1 // pred_check_branch
      %318 = sbr.rel (%p316) target = $region29
    $region28: #{tpu_custom_call.1} parent=1 // pred_region
      %v319 = vlaneseq
      %v320 = vshrl.u32 %v319, 7
      %v321 = vadd.s32 %v320, 8
      %v322 = vadd.s32 %v320, 16
      %v323 = vadd.s32 %v320, 24
      %v324 = vadd.s32 %v320, 32
      %v325 = vadd.s32 %v320, 40
      %v326 = vadd.s32 %v320, 48
      %v327 = vadd.s32 %v320, 56
      %v328 = vadd.s32 %v320, 64
      %v329 = vadd.s32 %v320, 72
      %v330 = vadd.s32 %v320, 80
      %v331 = vadd.s32 %v320, 88
      %v332 = vadd.s32 %v320, 96
      %v333 = vadd.s32 %v320, 104
      %v334 = vadd.s32 %v320, 112
      %v335 = vadd.s32 %v320, 120
      %v336 = vstv %s40
      %v337 = vadd.s32 %v336, %v320
      %v338 = vadd.s32 %v336, %v321
      %v339 = vadd.s32 %v336, %v322
      %v340 = vadd.s32 %v336, %v323
      %v341 = vadd.s32 %v336, %v324
      %v342 = vadd.s32 %v336, %v325
      %v343 = vadd.s32 %v336, %v326
      %v344 = vadd.s32 %v336, %v327
      %v345 = vadd.s32 %v336, %v328
      %v346 = vadd.s32 %v336, %v329
      %v347 = vadd.s32 %v336, %v330
      %v348 = vadd.s32 %v336, %v331
      %v349 = vadd.s32 %v336, %v332
      %v350 = vadd.s32 %v336, %v333
      %v351 = vadd.s32 %v336, %v334
      %v352 = vadd.s32 %v336, %v335
      %v353 = vlaneseq
      %v354 = vand.u32 %v353, 127
      %v355 = vstv %s310
      %v356 = vadd.s32 %v355, %v354
      %vm357 = vcmp.eq.s32.totalorder %v337, %v356
      %vm358 = vcmp.eq.s32.totalorder %v338, %v356
      %vm359 = vcmp.eq.s32.totalorder %v339, %v356
      %vm360 = vcmp.eq.s32.totalorder %v340, %v356
      %vm361 = vcmp.eq.s32.totalorder %v341, %v356
      %vm362 = vcmp.eq.s32.totalorder %v342, %v356
      %vm363 = vcmp.eq.s32.totalorder %v343, %v356
      %vm364 = vcmp.eq.s32.totalorder %v344, %v356
      %vm365 = vcmp.eq.s32.totalorder %v345, %v356
      %vm366 = vcmp.eq.s32.totalorder %v346, %v356
      %vm367 = vcmp.eq.s32.totalorder %v347, %v356
      %vm368 = vcmp.eq.s32.totalorder %v348, %v356
      %vm369 = vcmp.eq.s32.totalorder %v349, %v356
      %vm370 = vcmp.eq.s32.totalorder %v350, %v356
      %vm371 = vcmp.eq.s32.totalorder %v351, %v356
      %vm372 = vcmp.eq.s32.totalorder %v352, %v356
      %vm373 = vcmp.ge.s32.totalorder %v337, 16
      %vm374 = vcmp.ge.s32.totalorder %v338, 16
      %vm375 = vcmp.ge.s32.totalorder %v339, 16
      %vm376 = vcmp.ge.s32.totalorder %v340, 16
      %vm377 = vcmp.ge.s32.totalorder %v341, 16
      %vm378 = vcmp.ge.s32.totalorder %v342, 16
      %vm379 = vcmp.ge.s32.totalorder %v343, 16
      %vm380 = vcmp.ge.s32.totalorder %v344, 16
      %vm381 = vcmp.ge.s32.totalorder %v345, 16
      %vm382 = vcmp.ge.s32.totalorder %v346, 16
      %vm383 = vcmp.ge.s32.totalorder %v347, 16
      %vm384 = vcmp.ge.s32.totalorder %v348, 16
      %vm385 = vcmp.ge.s32.totalorder %v349, 16
      %vm386 = vcmp.ge.s32.totalorder %v350, 16
      %vm387 = vcmp.ge.s32.totalorder %v351, 16
      %vm388 = vcmp.ge.s32.totalorder %v352, 16
      %v389 = vsel %vm373, 1, 0
      %v390 = vsel %vm374, 1, 0
      %v391 = vsel %vm375, 1, 0
      %v392 = vsel %vm376, 1, 0
      %v393 = vsel %vm377, 1, 0
      %v394 = vsel %vm378, 1, 0
      %v395 = vsel %vm379, 1, 0
      %v396 = vsel %vm380, 1, 0
      %v397 = vsel %vm381, 1, 0
      %v398 = vsel %vm382, 1, 0
      %v399 = vsel %vm383, 1, 0
      %v400 = vsel %vm384, 1, 0
      %v401 = vsel %vm385, 1, 0
      %v402 = vsel %vm386, 1, 0
      %v403 = vsel %vm387, 1, 0
      %v404 = vsel %vm388, 1, 0
      %vm405 = vcmp.eq.s32.totalorder %v389, 1
      %vm406 = vcmp.eq.s32.totalorder %v390, 1
      %vm407 = vcmp.eq.s32.totalorder %v391, 1
      %vm408 = vcmp.eq.s32.totalorder %v392, 1
      %vm409 = vcmp.eq.s32.totalorder %v393, 1
      %vm410 = vcmp.eq.s32.totalorder %v394, 1
      %vm411 = vcmp.eq.s32.totalorder %v395, 1
      %vm412 = vcmp.eq.s32.totalorder %v396, 1
      %vm413 = vcmp.eq.s32.totalorder %v397, 1
      %vm414 = vcmp.eq.s32.totalorder %v398, 1
      %vm415 = vcmp.eq.s32.totalorder %v399, 1
      %vm416 = vcmp.eq.s32.totalorder %v400, 1
      %vm417 = vcmp.eq.s32.totalorder %v401, 1
      %vm418 = vcmp.eq.s32.totalorder %v402, 1
      %vm419 = vcmp.eq.s32.totalorder %v403, 1
      %vm420 = vcmp.eq.s32.totalorder %v404, 1
      %vm421 = vmor %vm357, %vm405
      %vm422 = vmor %vm358, %vm406
      %vm423 = vmor %vm359, %vm407
      %vm424 = vmor %vm360, %vm408
      %vm425 = vmor %vm361, %vm409
      %vm426 = vmor %vm362, %vm410
      %vm427 = vmor %vm363, %vm411
      %vm428 = vmor %vm364, %vm412
      %vm429 = vmor %vm365, %vm413
      %vm430 = vmor %vm366, %vm414
      %vm431 = vmor %vm367, %vm415
      %vm432 = vmor %vm368, %vm416
      %vm433 = vmor %vm369, %vm417
      %vm434 = vmor %vm370, %vm418
      %vm435 = vmor %vm371, %vm419
      %vm436 = vmor %vm372, %vm420
      %v437 = vsel %vm421, -1e+30, %v159
      %v438 = vsel %vm422, -1e+30, %v164
      %v439 = vsel %vm423, -1e+30, %v169
      %v440 = vsel %vm424, -1e+30, %v174
      %v441 = vsel %vm425, -1e+30, %v179
      %v442 = vsel %vm426, -1e+30, %v184
      %v443 = vsel %vm427, -1e+30, %v189
      %v444 = vsel %vm428, -1e+30, %v194
      %v445 = vsel %vm429, -1e+30, %v199
      %v446 = vsel %vm430, -1e+30, %v204
      %v447 = vsel %vm431, -1e+30, %v209
      %v448 = vsel %vm432, -1e+30, %v214
      %v449 = vsel %vm433, -1e+30, %v219
      %v450 = vsel %vm434, -1e+30, %v224
      %v451 = vsel %vm435, -1e+30, %v229
      %v452 = vsel %vm436, -1e+30, %v234
      %vm453 = vmxor %vm421, 1
      %vm454 = vmxor %vm422, 1
      %vm455 = vmxor %vm423, 1
      %vm456 = vmxor %vm424, 1
      %vm457 = vmxor %vm425, 1
      %vm458 = vmxor %vm426, 1
      %vm459 = vmxor %vm427, 1
      %vm460 = vmxor %vm428, 1
      %vm461 = vmxor %vm429, 1
      %vm462 = vmxor %vm430, 1
      %vm463 = vmxor %vm431, 1
      %vm464 = vmxor %vm432, 1
      %vm465 = vmxor %vm433, 1
      %vm466 = vmxor %vm434, 1
      %vm467 = vmxor %vm435, 1
      %vm468 = vmxor %vm436, 1
      %vm469 = vmand %vm289, %vm453
      %vm470 = vmand %vm290, %vm454
      %vm471 = vmand %vm291, %vm455
      %vm472 = vmand %vm292, %vm456
      %vm473 = vmand %vm293, %vm457
      %vm474 = vmand %vm294, %vm458
      %vm475 = vmand %vm295, %vm459
      %vm476 = vmand %vm296, %vm460
      %vm477 = vmand %vm297, %vm461
      %vm478 = vmand %vm298, %vm462
      %vm479 = vmand %vm299, %vm463
      %vm480 = vmand %vm300, %vm464
      %vm481 = vmand %vm301, %vm465
      %vm482 = vmand %vm302, %vm466
      %vm483 = vmand %vm303, %vm467
      %vm484 = vmand %vm304, %vm468
      %v485 = vld [vmem:[#allocation2] sm:$0x1]
      %v486 = vmax.f32 %v437, %v441
      %v487 = vmax.f32 %v438, %v442
      %v488 = vmax.f32 %v439, %v443
      %v489 = vmax.f32 %v440, %v444
      %v490 = vmax.f32 %v486, %v445
      %v491 = vmax.f32 %v487, %v446
      %v492 = vmax.f32 %v488, %v447
      %v493 = vmax.f32 %v489, %v448
      %v494 = vmax.f32 %v490, %v449
      %v495 = vmax.f32 %v491, %v450
      %v496 = vmax.f32 %v492, %v451
      %v497 = vmax.f32 %v493, %v452
      %v498 = vmax.f32 %v494, %v495
      %v499 = vmax.f32 %v496, %v497
      %v500 = vmax.f32 %v498, %v499
      %v501 = vrot.slane %v500, 4
      %v502 = vmax.f32 %v500, %v501
      %v503 = vrot.slane %v502, 2
      %v504 = vmax.f32 %v502, %v503
      %v505 = vrot.slane %v504, 1
      %v506 = vmax.f32 %v504, %v505
      %v507 = vmax.f32 %v485, %v506
      %v508 = vsub.f32 %v485, %v507
      %v509 = vmul.f32 %v508, 1.442695
      %v510 = vpow.pop %v509
      %v512 = vlaneseq
      %v513 = vshrl.u32 %v512, 7
      %v514 = vsub.s32 0, %v513
      %v515 = vrot.slane %v507, %v514
      %v517 = vsub.f32 %v437, %v515
      %v518 = vsub.f32 %v438, %v515
      %v519 = vsub.f32 %v439, %v515
      %v520 = vsub.f32 %v440, %v515
      %v521 = vsub.f32 %v441, %v515
      %v522 = vsub.f32 %v442, %v515
      %v523 = vsub.f32 %v443, %v515
      %v524 = vsub.f32 %v444, %v515
      %v525 = vsub.f32 %v445, %v515
      %v526 = vsub.f32 %v446, %v515
      %v527 = vsub.f32 %v447, %v515
      %v528 = vsub.f32 %v448, %v515
      %v529 = vsub.f32 %v449, %v515
      %v530 = vsub.f32 %v450, %v515
      %v531 = vsub.f32 %v451, %v515
      %v532 = vsub.f32 %v452, %v515
      %v533 = vmul.f32 %v517, 1.442695
      %v534 = vpow.pop %v533
      %v535 = vmul.f32 %v518, 1.442695
      %v536 = vpow.pop %v535
      %v537 = vmul.f32 %v519, 1.442695
      %v538 = vpow.pop %v537
      %v539 = vmul.f32 %v520, 1.442695
      %v540 = vpow.pop %v539
      %v541 = vmul.f32 %v521, 1.442695
      %v542 = vpow.pop %v541
      %v543 = vmul.f32 %v522, 1.442695
      %v544 = vpow.pop %v543
      %v545 = vmul.f32 %v523, 1.442695
      %v546 = vpow.pop %v545
      %v547 = vmul.f32 %v524, 1.442695
      %v548 = vpow.pop %v547
      %v549 = vmul.f32 %v525, 1.442695
      %v550 = vpow.pop %v549
      %v551 = vmul.f32 %v526, 1.442695
      %v552 = vpow.pop %v551
      %v553 = vmul.f32 %v527, 1.442695
      %v554 = vpow.pop %v553
      %v555 = vmul.f32 %v528, 1.442695
      %v556 = vpow.pop %v555
      %v557 = vmul.f32 %v529, 1.442695
      %v558 = vpow.pop %v557
      %v559 = vmul.f32 %v530, 1.442695
      %v560 = vpow.pop %v559
      %v561 = vmul.f32 %v531, 1.442695
      %v562 = vpow.pop %v561
      %v563 = vmul.f32 %v532, 1.442695
      %v564 = vpow.pop %v563
      %v565 = vld [vmem:[#allocation3] sm:$0x1]
      %v566 = vmul.f32 %v510, %v565
      %v567 = vadd.f32 %v534, %v536
      %v568 = vadd.f32 %v567, %v538
      %v569 = vadd.f32 %v568, %v540
      %v570 = vadd.f32 %v569, %v542
      %v571 = vadd.f32 %v570, %v544
      %v572 = vadd.f32 %v571, %v546
      %v573 = vadd.f32 %v572, %v548
      %v574 = vadd.f32 %v573, %v550
      %v575 = vadd.f32 %v574, %v552
      %v576 = vadd.f32 %v575, %v554
      %v577 = vadd.f32 %v576, %v556
      %v578 = vadd.f32 %v577, %v558
      %v579 = vadd.f32 %v578, %v560
      %v580 = vadd.f32 %v579, %v562
      %v581 = vadd.f32 %v580, %v564
      %v582 = vrot.slane %v581, 4
      %v583 = vadd.f32 %v581, %v582
      %v584 = vrot.slane %v583, 2
      %v585 = vadd.f32 %v583, %v584
      %v586 = vrot.slane %v585, 1
      %v587 = vadd.f32 %v585, %v586
      %v588 = vadd.f32 %v566, %v587
      %589 = vst [vmem:[#allocation3] sm:$0x1] %v588
      %590 = vst [vmem:[#allocation2] sm:$0x1] %v507
      %v591 = vsel %vm469, 1, 0
      %v592 = vsel %vm470, 1, 0
      %v593 = vsel %vm471, 1, 0
      %v594 = vsel %vm472, 1, 0
      %v595 = vsel %vm473, 1, 0
      %v596 = vsel %vm474, 1, 0
      %v597 = vsel %vm475, 1, 0
      %v598 = vsel %vm476, 1, 0
      %v599 = vsel %vm477, 1, 0
      %v600 = vsel %vm478, 1, 0
      %v601 = vsel %vm479, 1, 0
      %v602 = vsel %vm480, 1, 0
      %v603 = vsel %vm481, 1, 0
      %v604 = vsel %vm482, 1, 0
      %v605 = vsel %vm483, 1, 0
      %v606 = vsel %vm484, 1, 0
      %v607 = vcvt.s32.f32 %v591
      %v608 = vcvt.s32.f32 %v592
      %v609 = vcvt.s32.f32 %v593
      %v610 = vcvt.s32.f32 %v594
      %v611 = vcvt.s32.f32 %v595
      %v612 = vcvt.s32.f32 %v596
      %v613 = vcvt.s32.f32 %v597
      %v614 = vcvt.s32.f32 %v598
      %v615 = vcvt.s32.f32 %v599
      %v616 = vcvt.s32.f32 %v600
      %v617 = vcvt.s32.f32 %v601
      %v618 = vcvt.s32.f32 %v602
      %v619 = vcvt.s32.f32 %v603
      %v620 = vcvt.s32.f32 %v604
      %v621 = vcvt.s32.f32 %v605
      %v622 = vcvt.s32.f32 %v606
      %v623 = vld [vmem:[#allocation4] sm:$0x1]
      %v624 = vmul.f32 %v607, %v437
      %v625 = vmul.f32 %v608, %v438
      %v626 = vmul.f32 %v609, %v439
      %v627 = vmul.f32 %v610, %v440
      %v628 = vmul.f32 %v611, %v441
      %v629 = vmul.f32 %v612, %v442
      %v630 = vmul.f32 %v613, %v443
      %v631 = vmul.f32 %v614, %v444
      %v632 = vmul.f32 %v615, %v445
      %v633 = vmul.f32 %v616, %v446
      %v634 = vmul.f32 %v617, %v447
      %v635 = vmul.f32 %v618, %v448
      %v636 = vmul.f32 %v619, %v449
      %v637 = vmul.f32 %v620, %v450
      %v638 = vmul.f32 %v621, %v451
      %v639 = vmul.f32 %v622, %v452
      %v640 = vadd.f32 %v624, %v625
      %v641 = vadd.f32 %v640, %v626
      %v642 = vadd.f32 %v641, %v627
      %v643 = vadd.f32 %v642, %v628
      %v644 = vadd.f32 %v643, %v629
      %v645 = vadd.f32 %v644, %v630
      %v646 = vadd.f32 %v645, %v631
      %v647 = vadd.f32 %v646, %v632
      %v648 = vadd.f32 %v647, %v633
      %v649 = vadd.f32 %v648, %v634
      %v650 = vadd.f32 %v649, %v635
      %v651 = vadd.f32 %v650, %v636
      %v652 = vadd.f32 %v651, %v637
      %v653 = vadd.f32 %v652, %v638
      %v654 = vadd.f32 %v653, %v639
      %v655 = vrot.slane %v654, 4
      %v656 = vadd.f32 %v654, %v655
      %v657 = vrot.slane %v656, 2
      %v658 = vadd.f32 %v656, %v657
      %v659 = vrot.slane %v658, 1
      %v660 = vadd.f32 %v658, %v659
      %v661 = vadd.f32 %v623, %v660
      %662 = vst [vmem:[#allocation4] sm:$0x1] %v661
      %v663 = vld [vmem:[#allocation5] sm:$0x1]
      %v664 = vadd.f32 %v607, %v608
      %v665 = vadd.f32 %v664, %v609
      %v666 = vadd.f32 %v665, %v610
      %v667 = vadd.f32 %v666, %v611
      %v668 = vadd.f32 %v667, %v612
      %v669 = vadd.f32 %v668, %v613
      %v670 = vadd.f32 %v669, %v614
      %v671 = vadd.f32 %v670, %v615
      %v672 = vadd.f32 %v671, %v616
      %v673 = vadd.f32 %v672, %v617
      %v674 = vadd.f32 %v673, %v618
      %v675 = vadd.f32 %v674, %v619
      %v676 = vadd.f32 %v675, %v620
      %v677 = vadd.f32 %v676, %v621
      %v678 = vadd.f32 %v677, %v622
      %v679 = vrot.slane %v678, 4
      %v680 = vadd.f32 %v678, %v679
      %v681 = vrot.slane %v680, 2
      %v682 = vadd.f32 %v680, %v681
      %v683 = vrot.slane %v682, 1
      %v684 = vadd.f32 %v682, %v683
      %v685 = vadd.f32 %v663, %v684
      %686 = vst [vmem:[#allocation5] sm:$0x1] %v685
    $region29: #{tpu_custom_call.1} parent=1 // pred_fallthru
      _
    %p687 = pneg %p315
    // Predicated region
    $region30: #{tpu_custom_call.1} parent=1 // pred_check
      _
    $region31: #{tpu_custom_call.1} parent=1 // pred_check_branch
      %689 = sbr.rel (%p315) target = $region33
    $region32: #{tpu_custom_call.1} parent=1 // pred_region
      %v690 = vld [vmem:[#allocation2] sm:$0x1]
      %v691 = vmax.f32 %v159, %v179
      %v692 = vmax.f32 %v164, %v184
      %v693 = vmax.f32 %v169, %v189
      %v694 = vmax.f32 %v174, %v194
      %v695 = vmax.f32 %v691, %v199
      %v696 = vmax.f32 %v692, %v204
      %v697 = vmax.f32 %v693, %v209
      %v698 = vmax.f32 %v694, %v214
      %v699 = vmax.f32 %v695, %v219
      %v700 = vmax.f32 %v696, %v224
      %v701 = vmax.f32 %v697, %v229
      %v702 = vmax.f32 %v698, %v234
      %v703 = vmax.f32 %v699, %v700
      %v704 = vmax.f32 %v701, %v702
      %v705 = vmax.f32 %v703, %v704
      %v706 = vrot.slane %v705, 4
      %v707 = vmax.f32 %v705, %v706
      %v708 = vrot.slane %v707, 2
      %v709 = vmax.f32 %v707, %v708
      %v710 = vrot.slane %v709, 1
      %v711 = vmax.f32 %v709, %v710
      %v712 = vmax.f32 %v690, %v711
      %v713 = vsub.f32 %v690, %v712
      %v714 = vmul.f32 %v713, 1.442695
      %v715 = vpow.pop %v714
      %v717 = vlaneseq
      %v718 = vshrl.u32 %v717, 7
      %v719 = vsub.s32 0, %v718
      %v720 = vrot.slane %v712, %v719
      %v722 = vsub.f32 %v159, %v720
      %v723 = vsub.f32 %v164, %v720
      %v724 = vsub.f32 %v169, %v720
      %v725 = vsub.f32 %v174, %v720
      %v726 = vsub.f32 %v179, %v720
      %v727 = vsub.f32 %v184, %v720
      %v728 = vsub.f32 %v189, %v720
      %v729 = vsub.f32 %v194, %v720
      %v730 = vsub.f32 %v199, %v720
      %v731 = vsub.f32 %v204, %v720
      %v732 = vsub.f32 %v209, %v720
      %v733 = vsub.f32 %v214, %v720
      %v734 = vsub.f32 %v219, %v720
      %v735 = vsub.f32 %v224, %v720
      %v736 = vsub.f32 %v229, %v720
      %v737 = vsub.f32 %v234, %v720
      %v738 = vmul.f32 %v722, 1.442695
      %v739 = vpow.pop %v738
      %v740 = vmul.f32 %v723, 1.442695
      %v741 = vpow.pop %v740
      %v742 = vmul.f32 %v724, 1.442695
      %v743 = vpow.pop %v742
      %v744 = vmul.f32 %v725, 1.442695
      %v745 = vpow.pop %v744
      %v746 = vmul.f32 %v726, 1.442695
      %v747 = vpow.pop %v746
      %v748 = vmul.f32 %v727, 1.442695
      %v749 = vpow.pop %v748
      %v750 = vmul.f32 %v728, 1.442695
      %v751 = vpow.pop %v750
      %v752 = vmul.f32 %v729, 1.442695
      %v753 = vpow.pop %v752
      %v754 = vmul.f32 %v730, 1.442695
      %v755 = vpow.pop %v754
      %v756 = vmul.f32 %v731, 1.442695
      %v757 = vpow.pop %v756
      %v758 = vmul.f32 %v732, 1.442695
      %v759 = vpow.pop %v758
      %v760 = vmul.f32 %v733, 1.442695
      %v761 = vpow.pop %v760
      %v762 = vmul.f32 %v734, 1.442695
      %v763 = vpow.pop %v762
      %v764 = vmul.f32 %v735, 1.442695
      %v765 = vpow.pop %v764
      %v766 = vmul.f32 %v736, 1.442695
      %v767 = vpow.pop %v766
      %v768 = vmul.f32 %v737, 1.442695
      %v769 = vpow.pop %v768
      %v770 = vld [vmem:[#allocation3] sm:$0x1]
      %v771 = vmul.f32 %v715, %v770
      %v772 = vadd.f32 %v739, %v741
      %v773 = vadd.f32 %v772, %v743
      %v774 = vadd.f32 %v773, %v745
      %v775 = vadd.f32 %v774, %v747
      %v776 = vadd.f32 %v775, %v749
      %v777 = vadd.f32 %v776, %v751
      %v778 = vadd.f32 %v777, %v753
      %v779 = vadd.f32 %v778, %v755
      %v780 = vadd.f32 %v779, %v757
      %v781 = vadd.f32 %v780, %v759
      %v782 = vadd.f32 %v781, %v761
      %v783 = vadd.f32 %v782, %v763
      %v784 = vadd.f32 %v783, %v765
      %v785 = vadd.f32 %v784, %v767
      %v786 = vadd.f32 %v785, %v769
      %v787 = vrot.slane %v786, 4
      %v788 = vadd.f32 %v786, %v787
      %v789 = vrot.slane %v788, 2
      %v790 = vadd.f32 %v788, %v789
      %v791 = vrot.slane %v790, 1
      %v792 = vadd.f32 %v790, %v791
      %v793 = vadd.f32 %v771, %v792
      %794 = vst [vmem:[#allocation3] sm:$0x1] %v793
      %795 = vst [vmem:[#allocation2] sm:$0x1] %v712
      %v796 = vsel %vm289, 1, 0
      %v797 = vsel %vm290, 1, 0
      %v798 = vsel %vm291, 1, 0
      %v799 = vsel %vm292, 1, 0
      %v800 = vsel %vm293, 1, 0
      %v801 = vsel %vm294, 1, 0
      %v802 = vsel %vm295, 1, 0
      %v803 = vsel %vm296, 1, 0
      %v804 = vsel %vm297, 1, 0
      %v805 = vsel %vm298, 1, 0
      %v806 = vsel %vm299, 1, 0
      %v807 = vsel %vm300, 1, 0
      %v808 = vsel %vm301, 1, 0
      %v809 = vsel %vm302, 1, 0
      %v810 = vsel %vm303, 1, 0
      %v811 = vsel %vm304, 1, 0
      %v812 = vcvt.s32.f32 %v796
      %v813 = vcvt.s32.f32 %v797
      %v814 = vcvt.s32.f32 %v798
      %v815 = vcvt.s32.f32 %v799
      %v816 = vcvt.s32.f32 %v800
      %v817 = vcvt.s32.f32 %v801
      %v818 = vcvt.s32.f32 %v802
      %v819 = vcvt.s32.f32 %v803
      %v820 = vcvt.s32.f32 %v804
      %v821 = vcvt.s32.f32 %v805
      %v822 = vcvt.s32.f32 %v806
      %v823 = vcvt.s32.f32 %v807
      %v824 = vcvt.s32.f32 %v808
      %v825 = vcvt.s32.f32 %v809
      %v826 = vcvt.s32.f32 %v810
      %v827 = vcvt.s32.f32 %v811
      %v828 = vld [vmem:[#allocation4] sm:$0x1]
      %v829 = vmul.f32 %v812, %v159
      %v830 = vmul.f32 %v813, %v164
      %v831 = vmul.f32 %v814, %v169
      %v832 = vmul.f32 %v815, %v174
      %v833 = vmul.f32 %v816, %v179
      %v834 = vmul.f32 %v817, %v184
      %v835 = vmul.f32 %v818, %v189
      %v836 = vmul.f32 %v819, %v194
      %v837 = vmul.f32 %v820, %v199
      %v838 = vmul.f32 %v821, %v204
      %v839 = vmul.f32 %v822, %v209
      %v840 = vmul.f32 %v823, %v214
      %v841 = vmul.f32 %v824, %v219
      %v842 = vmul.f32 %v825, %v224
      %v843 = vmul.f32 %v826, %v229
      %v844 = vmul.f32 %v827, %v234
      %v845 = vadd.f32 %v829, %v830
      %v846 = vadd.f32 %v845, %v831
      %v847 = vadd.f32 %v846, %v832
      %v848 = vadd.f32 %v847, %v833
      %v849 = vadd.f32 %v848, %v834
      %v850 = vadd.f32 %v849, %v835
      %v851 = vadd.f32 %v850, %v836
      %v852 = vadd.f32 %v851, %v837
      %v853 = vadd.f32 %v852, %v838
      %v854 = vadd.f32 %v853, %v839
      %v855 = vadd.f32 %v854, %v840
      %v856 = vadd.f32 %v855, %v841
      %v857 = vadd.f32 %v856, %v842
      %v858 = vadd.f32 %v857, %v843
      %v859 = vadd.f32 %v858, %v844
      %v860 = vrot.slane %v859, 4
      %v861 = vadd.f32 %v859, %v860
      %v862 = vrot.slane %v861, 2
      %v863 = vadd.f32 %v861, %v862
      %v864 = vrot.slane %v863, 1
      %v865 = vadd.f32 %v863, %v864
      %v866 = vadd.f32 %v828, %v865
      %867 = vst [vmem:[#allocation4] sm:$0x1] %v866
      %v868 = vld [vmem:[#allocation5] sm:$0x1]
      %v869 = vadd.f32 %v812, %v813
      %v870 = vadd.f32 %v869, %v814
      %v871 = vadd.f32 %v870, %v815
      %v872 = vadd.f32 %v871, %v816
      %v873 = vadd.f32 %v872, %v817
      %v874 = vadd.f32 %v873, %v818
      %v875 = vadd.f32 %v874, %v819
      %v876 = vadd.f32 %v875, %v820
      %v877 = vadd.f32 %v876, %v821
      %v878 = vadd.f32 %v877, %v822
      %v879 = vadd.f32 %v878, %v823
      %v880 = vadd.f32 %v879, %v824
      %v881 = vadd.f32 %v880, %v825
      %v882 = vadd.f32 %v881, %v826
      %v883 = vadd.f32 %v882, %v827
      %v884 = vrot.slane %v883, 4
      %v885 = vadd.f32 %v883, %v884
      %v886 = vrot.slane %v885, 2
      %v887 = vadd.f32 %v885, %v886
      %v888 = vrot.slane %v887, 1
      %v889 = vadd.f32 %v887, %v888
      %v890 = vadd.f32 %v868, %v889
      %891 = vst [vmem:[#allocation5] sm:$0x1] %v890
    $region33: #{tpu_custom_call.1} parent=1 // pred_fallthru
      _
    // Predicated region
    $region34: #{tpu_custom_call.1} parent=1 // pred_check
      %p892 = pneg %p32
    $region35: #{tpu_custom_call.1} parent=1 // pred_check_branch
      %894 = sbr.rel (%p892) target = $region37
    $region36: #{tpu_custom_call.1} parent=1 // pred_region
      %v895 = vld [vmem:[#allocation2] sm:$0x1]
      %v896 = vld [vmem:[#allocation3] sm:$0x1]
      %v897 = vlog2.pop %v896
      %v898 = vmul.f32 %v897, 0.6931472
      %v899 = vadd.f32 %v895, %v898
      %v900 = vld [vmem:[#allocation4] sm:$0x1]
      %v901 = vld [vmem:[#allocation5] sm:$0x1]
      %v902 = vrcp.pop %v901
      %v903 = vmul.f32 %v900, %v902
      %v904 = vsub.f32 %v903, %v899
      %v905 = vmul.f32 %v904, -1.0
      %906 = vst [vmem:[#allocation9] sm:$0x1] %v905
    $region37: #{tpu_custom_call.1} parent=1 // pred_fallthru
      _
    // Predicated region
    $region38: #{tpu_custom_call.1} parent=1 // pred_check
      _
    $region39: #{tpu_custom_call.1} parent=1 // pred_check_branch
      %908 = sbr.rel (0) target = $region41
    $region40: #{tpu_custom_call.1} parent=1 // pred_region
      %s910 = ssub.s32 16, 16
      %911 = vsyncadd [#allocation8], %s910
      %s913 = sshll.u32 [#allocation9], 4
      %s914 = int_to_ptr.vmem [resolvable:$true] %s913
      %916 = dma.vmem_to_hbm [thread:$0]  %s914, 16, %s4, [#allocation8]
    $region41: #{tpu_custom_call.1} parent=1 // pred_fallthru
      _
    // Predicated region
    $region42: #{tpu_custom_call.1} parent=1 // pred_check
      _
    $region43: #{tpu_custom_call.1} parent=1 // pred_check_branch
      %918 = sbr.rel (0) target = $region45
    $region44: #{tpu_custom_call.1} parent=1 // pred_region
      %919 = dma.done [#allocation8], 16
    $region45: #{tpu_custom_call.1} parent=1 // pred_fallthru
      _
    %920 = vsyncpa [#allocation7], 1
    %921 = vsyncpa [#allocation8], 1

</llo_original>
